<compile_context>
chip_gen: v7x
topology: tpu7x:2x2x1
jax: 0.10.0
libtpu: 0.0.40
codegen_flags: <defaults>
</compile_context>

<pallas_src>
from functools import partial

import jax
import jax.numpy as jnp
from jax.experimental import pallas as pl
from jax.experimental.pallas import tpu as pltpu


def _round_up(x, m):
    return ((x + m - 1) // m) * m


# ---------------------------------------------------------------------------
# Kernel
# ---------------------------------------------------------------------------
def mlp_kernel(x_ref, w1_ref, b1_ref, w2_ref, b2_ref, o_ref, acc_ref, *,
               feat_dim, tk):
    """Grid = (batch_tiles, k_tiles). K (feature reduction) axis is last."""
    k = pl.program_id(1)

    @pl.when(k == 0)
    def _():
        acc_ref[...] = jnp.zeros_like(acc_ref)

    x = x_ref[...]
    if feat_dim % tk != 0:
        # Static check: the last K block is partial. Out-of-bounds x columns
        # contain stale VMEM garbage; mask them to zero (W1 padded rows are
        # zero on the host side, so the contribution is exactly 0).
        col = jax.lax.broadcasted_iota(jnp.int32, x.shape, 1) + k * tk
        x = jnp.where(col < feat_dim, x, 0.0)

    # Layer 1 partial product: (TB, tk) @ (tk, 128), f32 accumulation on MXU.
    acc_ref[...] += jnp.dot(x, w1_ref[...], preferred_element_type=jnp.float32)

    @pl.when(k == pl.num_programs(1) - 1)
    def _():
        h = jnp.maximum(acc_ref[...] + b1_ref[...], 0.0)          # bias + ReLU
        # Layer 2: (TB, 128) @ (128, 64); store only the real 64 columns.
        y = jnp.dot(h, w2_ref[...], preferred_element_type=jnp.float32)
        o_ref[...] = jnp.maximum(y + b2_ref[...], 0.0)            # bias + ReLU


# ---------------------------------------------------------------------------
# Hardware / tiling plan
# ---------------------------------------------------------------------------
_DEFAULT_VMEM = 64 * 1024 * 1024  # v7x-safe fallback (64 MiB per TensorCore)


def _vmem_plan():
    cap = _DEFAULT_VMEM
    try:
        info = pltpu.get_tpu_info()
        cap = int(getattr(info, "vmem_capacity_bytes", _DEFAULT_VMEM))
    except Exception:
        pass
    budget = int(cap * 0.70)       # model budget for tile picking
    vmem_limit = int(cap * 0.90)   # compiler scoped-VMEM limit
    return budget, vmem_limit


def _num_tensorcores():
    try:
        kind = jax.devices()[0].device_kind.lower()
    except Exception:
        return 1
    # v7x exposes 2 TensorCores per device; v5e/v6e expose 1.
    return 2 if ("v7" in kind or "7x" in kind) else 1


def _max_tile_b(tk, w1_bufs, budget, b_cap, h1):
    """Largest multiple-of-8 batch tile fitting the VMEM budget (f32 path)."""
    tk_lane = _round_up(tk, 128)          # x lane-pads inside VMEM
    # Per-batch-row bytes: x (2 buffers) + out (2 buffers, 64->128 lanes)
    # + accumulator + h/y/dot-result temps headroom.
    per_row = 2 * tk_lane * 4 + (2 + 1 + 3) * h1 * 4
    fixed = (w1_bufs * _round_up(tk, 8) * h1 * 4   # W1 block buffer(s)
             + h1 * 128 * 4                        # W2 (lane-padded in VMEM)
             + 4 * 8 * 128 * 4)                    # b1, b2 + slack
    avail = budget - fixed
    if avail <= per_row * 8:
        return 8
    tb = min(avail // per_row, b_cap, 8192)
    return max(8, (tb // 8) * 8)


def _plan(B, F, H1, budget, num_tc, force_k_tiling):
    b8 = _round_up(B, 8)
    tk, grid_k = F, 1
    tb = _max_tile_b(F, 1, budget, b8, H1)
    need_ktile = force_k_tiling or tb < min(b8, 256)
    if need_ktile and F > 128:
        tk = min(512, _round_up(F, 128))
        grid_k = pl.cdiv(F, tk)
        w1_bufs = 2 if grid_k > 1 else 1
        tb = _max_tile_b(tk, w1_bufs, budget, b8, H1)
    # Megacore balance: on 2-TC chips, split into an even number of ~equal
    # batch steps so both cores stay busy; on 1-TC chips one big step is fine.
    if num_tc >= 2 and b8 > 8:
        steps = max(2, pl.cdiv(b8, tb))
        if steps % 2:
            steps += 1
        tb = min(tb, max(8, _round_up(pl.cdiv(b8, steps), 8)))
    return tb, tk, grid_k


def _spec(shape, index_map, single_buffer=False):
    """BlockSpec; constant-index blocks are single-buffered when supported."""
    if single_buffer:
        try:
            return pl.BlockSpec(shape, index_map, pipeline_mode=pl.Buffered(1))
        except Exception:
            pass
    return pl.BlockSpec(shape, index_map)


# ---------------------------------------------------------------------------
# Wrapper
# ---------------------------------------------------------------------------
@partial(jax.jit, static_argnames=("force_k_tiling",))
def modal_mlp_forward(x, w1, b1, w2, b2, *, force_k_tiling=False):
    """x: (B, input_dim, 100) float32. Returns (B, 64) float32."""
    B = x.shape[0]
    x2 = x.reshape(B, -1).astype(jnp.float32)      # nn.Flatten, row-major
    F = x2.shape[1]
    H1 = w1.shape[1]
    H2 = w2.shape[1]

    budget, vmem_limit = _vmem_plan()
    num_tc = _num_tensorcores()
    tile_b, tk, grid_k = _plan(B, F, H1, budget, num_tc, force_k_tiling)

    # Zero-pad W1 rows so the K grid divides evenly (cheap; W1 is small).
    F_pad = tk * grid_k
    w1p = w1.astype(jnp.float32)
    if F_pad > F:
        w1p = jnp.pad(w1p, ((0, F_pad - F), (0, 0)))
    w2f = w2.astype(jnp.float32)
    b1_2d = b1.reshape(1, H1).astype(jnp.float32)
    b2_2d = b2.reshape(1, H2).astype(jnp.float32)

    grid = (pl.cdiv(B, tile_b), grid_k)
    kernel = partial(mlp_kernel, feat_dim=F, tk=tk)

    cost = pl.CostEstimate(
        flops=2 * B * F * H1 + 2 * B * H1 * H2,
        transcendentals=0,
        bytes_accessed=(x2.size * 4 + w1p.size * 4 + w2f.size * 4
                        + (H1 + H2) * 4 + B * H2 * 4),
    )

    out = pl.pallas_call(
        kernel,
        out_shape=jax.ShapeDtypeStruct((B, H2), jnp.float32),
        grid=grid,
        in_specs=[
            pl.BlockSpec((tile_b, tk), lambda i, k: (i, k)),        # x tile
            _spec((tk, H1), lambda i, k: (k, 0),
                  single_buffer=(grid_k == 1)),                     # W1
            _spec((1, H1), lambda i, k: (0, 0), single_buffer=True),   # b1
            _spec((H1, H2), lambda i, k: (0, 0), single_buffer=True),  # W2
            _spec((1, H2), lambda i, k: (0, 0), single_buffer=True),   # b2
        ],
        out_specs=pl.BlockSpec((tile_b, H2), lambda i, k: (i, 0)),
        scratch_shapes=[pltpu.VMEM((tile_b, H1), jnp.float32)],     # layer-1 acc
        compiler_params=pltpu.CompilerParams(
            dimension_semantics=("parallel", "arbitrary"),
            vmem_limit_bytes=vmem_limit,
        ),
        cost_estimate=cost,
    )(x2, w1p, b1_2d, w2f, b2_2d)

    return out


def init_params(input_dim, key):
    """Deterministic init mirroring PyTorch Linear default (+-1/sqrt(fan_in))."""
    F = input_dim * 100
    k1, k2, k3, k4 = jax.random.split(key, 4)
    bound1 = 1.0 / jnp.sqrt(F)
    bound2 = 1.0 / jnp.sqrt(128.0)
    w1 = jax.random.uniform(k1, (F, 128), jnp.float32, -bound1, bound1)
    b1 = jax.random.uniform(k2, (128,), jnp.float32, -bound1, bound1)
    w2 = jax.random.uniform(k3, (128, 64), jnp.float32, -bound2, bound2)
    b2 = jax.random.uniform(k4, (64,), jnp.float32, -bound2, bound2)
    return w1, b1, w2, b2


if __name__ == "__main__":
    key = jax.random.PRNGKey(0)
    k_x, k_p, k_x2, k_p2 = jax.random.split(key, 4)

    def reference(x, w1, b1, w2, b2):
        xf = x.reshape(x.shape[0], -1)
        h = jnp.maximum(
            jnp.dot(xf, w1, preferred_element_type=jnp.float32,
                    precision=jax.lax.Precision.HIGHEST) + b1, 0.0)
        return jnp.maximum(
            jnp.dot(h, w2, preferred_element_type=jnp.float32,
                    precision=jax.lax.Precision.HIGHEST) + b2, 0.0)

    # Case 1: small ModalMLP (input_dim=4 -> 400 features), single-K-block path.
    batch, input_dim = 2, 4
    x = jax.random.normal(k_x, (batch, input_dim, 100), jnp.float32)
    params = init_params(input_dim, k_p)
    out = jax.block_until_ready(modal_mlp_forward(x, *params))
    ref = reference(x, *params)
    assert out.shape == (batch, 64), out.shape
    assert jnp.allclose(out, ref, atol=5e-3, rtol=5e-3), \
        float(jnp.max(jnp.abs(out - ref)))

    # Case 2: exercise the K-tiled reduction path + partial tail blocks.
    batch2, input_dim2 = 10, 8
    x2 = jax.random.normal(k_x2, (batch2, input_dim2, 100), jnp.float32)
    params2 = init_params(input_dim2, k_p2)
    out2 = jax.block_until_ready(
        modal_mlp_forward(x2, *params2, force_k_tiling=True))
    ref2 = reference(x2, *params2)
    assert out2.shape == (batch2, 64), out2.shape
    assert jnp.allclose(out2, ref2, atol=5e-3, rtol=5e-3), \
        float(jnp.max(jnp.abs(out2 - ref2)))

    print("KERNEL_OK")
</pallas_src>

<mosaic_0001>
module attributes {stable_mosaic.version = 11 : i64} {
  func.func @mlp_kernel(%arg0: i32, %arg1: i32, %arg2: memref<8x400xf32, #tpu.memory_space<vmem>>, %arg3: memref<400x128xf32, #tpu.memory_space<vmem>>, %arg4: memref<1x128xf32, #tpu.memory_space<vmem>>, %arg5: memref<128x64xf32, #tpu.memory_space<vmem>>, %arg6: memref<1x64xf32, #tpu.memory_space<vmem>>, %arg7: memref<8x64xf32, #tpu.memory_space<vmem>>, %arg8: memref<8x128xf32, #tpu.memory_space<vmem>>) attributes {dimension_semantics = [#tpu.dimension_semantics<parallel>, #tpu.dimension_semantics<arbitrary>], iteration_bounds = array<i64: 1, 1>, scalar_prefetch = 0 : i64, scratch_operands = 1 : i64, tpu.core_type = #tpu.core_type<tc>, window_params = [{transform_indices = @transform_0, window_bounds = array<i64: 8, 400>}, {pipeline_mode = #tpu.pipeline_mode<synchronous>, transform_indices = @transform_1, window_bounds = array<i64: 400, 128>}, {pipeline_mode = #tpu.pipeline_mode<synchronous>, transform_indices = @transform_2, window_bounds = array<i64: 1, 128>}, {pipeline_mode = #tpu.pipeline_mode<synchronous>, transform_indices = @transform_3, window_bounds = array<i64: 128, 64>}, {pipeline_mode = #tpu.pipeline_mode<synchronous>, transform_indices = @transform_4, window_bounds = array<i64: 1, 64>}, {transform_indices = @transform_5, window_bounds = array<i64: 8, 64>}]} {
    %c0_i32 = arith.constant 0 : i32
    %0 = arith.cmpi eq, %arg1, %c0_i32 : i32
    %1 = arith.extui %0 : i1 to i32
    %c0_i32_0 = arith.constant 0 : i32
    %2 = arith.cmpi ne, %1, %c0_i32_0 : i32
    scf.if %2 {
      %cst_10 = arith.constant 0.000000e+00 : f32
      %12 = vector.broadcast %cst_10 : f32 to vector<8x128xf32>
      %c0_11 = arith.constant 0 : index
      %c0_12 = arith.constant 0 : index
      %13 = vector.load %arg8[%c0_11, %c0_12] : memref<8x128xf32, #tpu.memory_space<vmem>>, vector<8x128xf32>
      tpu.vector_store %arg8[%c0_11, %c0_12], %12 {strides = array<i32>} : memref<8x128xf32, #tpu.memory_space<vmem>>, vector<8x128xf32>,
    } else {
    }
    %c0 = arith.constant 0 : index
    %c0_1 = arith.constant 0 : index
    %3 = vector.load %arg2[%c0, %c0_1] : memref<8x400xf32, #tpu.memory_space<vmem>>, vector<8x400xf32>
    %c0_2 = arith.constant 0 : index
    %c0_3 = arith.constant 0 : index
    %4 = vector.load %arg8[%c0_2, %c0_3] : memref<8x128xf32, #tpu.memory_space<vmem>>, vector<8x128xf32>
    %c0_4 = arith.constant 0 : index
    %c0_5 = arith.constant 0 : index
    %5 = vector.load %arg3[%c0_4, %c0_5] : memref<400x128xf32, #tpu.memory_space<vmem>>, vector<400x128xf32>
    %cst = arith.constant dense<0.000000e+00> : vector<8x128xf32>
    %6 = tpu.matmul %3, %5, %cst {dimension_numbers = #tpu.dot_dimension_numbers<[1], [0], [0], [1], [0, 0, 1, 1], [], []>} : vector<8x400xf32>, vector<400x128xf32>, vector<8x128xf32> -> vector<8x128xf32>
    %7 = arith.addf %4, %6 : vector<8x128xf32>
    %c0_6 = arith.constant 0 : index
    %c0_7 = arith.constant 0 : index
    %8 = vector.load %arg8[%c0_6, %c0_7] : memref<8x128xf32, #tpu.memory_space<vmem>>, vector<8x128xf32>
    tpu.vector_store %arg8[%c0_6, %c0_7], %7 {strides = array<i32>} : memref<8x128xf32, #tpu.memory_space<vmem>>, vector<8x128xf32>,
    %c0_i32_8 = arith.constant 0 : i32
    %9 = arith.cmpi eq, %arg1, %c0_i32_8 : i32
    %10 = arith.extui %9 : i1 to i32
    %c0_i32_9 = arith.constant 0 : i32
    %11 = arith.cmpi ne, %10, %c0_i32_9 : i32
    scf.if %11 {
      %c0_10 = arith.constant 0 : index
      %c0_11 = arith.constant 0 : index
      %12 = vector.load %arg8[%c0_10, %c0_11] : memref<8x128xf32, #tpu.memory_space<vmem>>, vector<8x128xf32>
      %c0_12 = arith.constant 0 : index
      %c0_13 = arith.constant 0 : index
      %13 = vector.load %arg4[%c0_12, %c0_13] : memref<1x128xf32, #tpu.memory_space<vmem>>, vector<1x128xf32>
      %14 = vector.broadcast %13 : vector<1x128xf32> to vector<8x128xf32>
      %15 = arith.addf %12, %14 : vector<8x128xf32>
      %cst_14 = arith.constant 0.000000e+00 : f32
      %16 = vector.broadcast %cst_14 : f32 to vector<8x128xf32>
      %17 = arith.maximumf %15, %16 : vector<8x128xf32>
      %c0_15 = arith.constant 0 : index
      %c0_16 = arith.constant 0 : index
      %18 = vector.load %arg5[%c0_15, %c0_16] : memref<128x64xf32, #tpu.memory_space<vmem>>, vector<128x64xf32>
      %cst_17 = arith.constant dense<0.000000e+00> : vector<8x64xf32>
      %19 = tpu.matmul %17, %18, %cst_17 {dimension_numbers = #tpu.dot_dimension_numbers<[1], [0], [0], [1], [0, 0, 1, 1], [], []>} : vector<8x128xf32>, vector<128x64xf32>, vector<8x64xf32> -> vector<8x64xf32>
      %c0_18 = arith.constant 0 : index
      %c0_19 = arith.constant 0 : index
      %20 = vector.load %arg6[%c0_18, %c0_19] : memref<1x64xf32, #tpu.memory_space<vmem>>, vector<1x64xf32>
      %21 = vector.broadcast %20 : vector<1x64xf32> to vector<8x64xf32>
      %22 = arith.addf %19, %21 : vector<8x64xf32>
      %cst_20 = arith.constant 0.000000e+00 : f32
      %23 = vector.broadcast %cst_20 : f32 to vector<8x64xf32>
      %24 = arith.maximumf %22, %23 : vector<8x64xf32>
      %c0_21 = arith.constant 0 : index
      %c0_22 = arith.constant 0 : index
      %25 = vector.load %arg7[%c0_21, %c0_22] : memref<8x64xf32, #tpu.memory_space<vmem>>, vector<8x64xf32>
      tpu.vector_store %arg7[%c0_21, %c0_22], %24 {strides = array<i32>} : memref<8x64xf32, #tpu.memory_space<vmem>>, vector<8x64xf32>,
    } else {
    }
    return
  }
  func.func @transform_0(%arg0: i32, %arg1: i32) -> (i32, i32) {
    %c0_i32 = arith.constant 0 : i32
    return %arg0, %arg1 : i32, i32
  }
  func.func @transform_1(%arg0: i32, %arg1: i32) -> (i32, i32) {
    %c0_i32 = arith.constant 0 : i32
    %c0_i32_0 = arith.constant 0 : i32
    return %arg1, %c0_i32 : i32, i32
  }
  func.func @transform_2(%arg0: i32, %arg1: i32) -> (i32, i32) {
    %c0_i32 = arith.constant 0 : i32
    %c0_i32_0 = arith.constant 0 : i32
    %c0_i32_1 = arith.constant 0 : i32
    return %c0_i32, %c0_i32_0 : i32, i32
  }
  func.func @transform_3(%arg0: i32, %arg1: i32) -> (i32, i32) {
    %c0_i32 = arith.constant 0 : i32
    %c0_i32_0 = arith.constant 0 : i32
    %c0_i32_1 = arith.constant 0 : i32
    return %c0_i32, %c0_i32_0 : i32, i32
  }
  func.func @transform_4(%arg0: i32, %arg1: i32) -> (i32, i32) {
    %c0_i32 = arith.constant 0 : i32
    %c0_i32_0 = arith.constant 0 : i32
    %c0_i32_1 = arith.constant 0 : i32
    return %c0_i32, %c0_i32_0 : i32, i32
  }
  func.func @transform_5(%arg0: i32, %arg1: i32) -> (i32, i32) {
    %c0_i32 = arith.constant 0 : i32
    %c0_i32_0 = arith.constant 0 : i32
    return %arg0, %c0_i32 : i32, i32
  }
}

</mosaic_0001>

<llo_original>
// kernel: modal_mlp_forward.1
$region0: #{modal_mlp_forward.1}
  #allocation0 [shape = 'u32[]', space=smem, size = 0x4, offset = 0x4, fixed_abs, tag = 'smem constant byte address 0x4 - core index']
  #allocation1 [shape = 'u32[144,128]{1,0:T(1,128)}', space=vmem, size = 0x12000, scoped, tag = 'internal scratch']
  #allocation2 [shape = 'f32[8,128]{1,0:T(8,128)}', space=vmem, size = 0x1000, scoped, tag = 'scratch operand']
  %s0 = inlined_call_operand.vmem [shape: f32[2,400], index: 0, kind: input, shape index: {}]
  %s1 = inlined_call_operand.hbm [shape: f32[400,128], index: 1, kind: input, shape index: {}]
  %s2 = inlined_call_operand.vmem [shape: f32[1,128], index: 2, kind: input, shape index: {}]
  %s3 = inlined_call_operand.vmem [shape: f32[128,64], index: 3, kind: input, shape index: {}]
  %s4 = inlined_call_operand.vmem [shape: f32[1,64], index: 4, kind: input, shape index: {}]
  %s5 = inlined_call_operand.hbm [shape: f32[2,64], index: 5, kind: output, shape index: {}]
  %s6 = sld [smem:[#allocation0]]
  $region42: #{modal_mlp_forward.1} parent=0
    _
  %s8 = ssub.s32 1, %s6
  %s9 = scalar_select 0, %s8, %s6
  $region1: #{modal_mlp_forward.1} parent=0
    #allocation3 [shape = 'u8[204800]{0}', space=vmem, size = 0x32000, scoped, tag = 'input window, operand 1, single buffered']
    #allocation4 [shape = 's32[1]{0}', space=sflag, size = 0x4, scoped, tag = 'scoped memory for modal_mlp_forward.1']
    #allocation5 [shape = 's32[1]{0}', space=sflag, size = 0x4, scoped, tag = 'scoped memory for modal_mlp_forward.1']
    #allocation6 [shape = 'u8[4096]{0}', space=vmem, size = 0x1000, scoped, tag = 'output window, operand 0, single buffered']
    %10 = vsyncpa [#allocation4], 0
    %11 = vsyncpa [#allocation5], 0
    // Predicated region
    $region2: #{modal_mlp_forward.1} parent=1 // pred_check
      _
    $region3: #{modal_mlp_forward.1} parent=1 // pred_check_branch
      %13 = sbr.rel (0) target = $region5
    $region4: #{modal_mlp_forward.1} parent=1 // pred_region
      _
    $region5: #{modal_mlp_forward.1} parent=1 // pred_fallthru
      _
    // Predicated region
    $region6: #{modal_mlp_forward.1} parent=1 // pred_check
      _
    $region7: #{modal_mlp_forward.1} parent=1 // pred_check_branch
      %15 = sbr.rel (0) target = $region9
    $region8: #{modal_mlp_forward.1} parent=1 // pred_region
      %s17 = ssub.s32 6400, 6400
      %18 = vsyncadd [#allocation4], %s17
      %s19 = sshll.u32 [#allocation3], 4
      %s20 = int_to_ptr.vmem [resolvable:$true] %s19
      %25 = dma.hbm_to_vmem [thread:$0]  %s1, 6400, %s20, [#allocation4], 128, 128, 8
    $region9: #{modal_mlp_forward.1} parent=1 // pred_fallthru
      _
    // Predicated region
    $region10: #{modal_mlp_forward.1} parent=1 // pred_check
      _
    $region11: #{modal_mlp_forward.1} parent=1 // pred_check_branch
      %27 = sbr.rel (0) target = $region13
    $region12: #{modal_mlp_forward.1} parent=1 // pred_region
      _
    $region13: #{modal_mlp_forward.1} parent=1 // pred_fallthru
      _
    // Predicated region
    $region14: #{modal_mlp_forward.1} parent=1 // pred_check
      _
    $region15: #{modal_mlp_forward.1} parent=1 // pred_check_branch
      %29 = sbr.rel (0) target = $region17
    $region16: #{modal_mlp_forward.1} parent=1 // pred_region
      _
    $region17: #{modal_mlp_forward.1} parent=1 // pred_fallthru
      _
    // Predicated region
    $region18: #{modal_mlp_forward.1} parent=1 // pred_check
      _
    $region19: #{modal_mlp_forward.1} parent=1 // pred_check_branch
      %31 = sbr.rel (0) target = $region21
    $region20: #{modal_mlp_forward.1} parent=1 // pred_region
      _
    $region21: #{modal_mlp_forward.1} parent=1 // pred_fallthru
      _
    // Predicated region
    $region22: #{modal_mlp_forward.1} parent=1 // pred_check
      _
    $region23: #{modal_mlp_forward.1} parent=1 // pred_check_branch
      %33 = sbr.rel (0) target = $region25
    $region24: #{modal_mlp_forward.1} parent=1 // pred_region
      %34 = dma.done [#allocation4], 6400
    $region25: #{modal_mlp_forward.1} parent=1 // pred_fallthru
      _
    %p35 = scmp.eq.s32.totalorder 0, 0
    // Predicated region
    $region26: #{modal_mlp_forward.1} parent=1 // pred_check
      %p36 = pneg %p35
    $region27: #{modal_mlp_forward.1} parent=1 // pred_check_branch
      %38 = sbr.rel (%p36) target = $region29
    $region28: #{modal_mlp_forward.1} parent=1 // pred_region
      %39 = vst [vmem:[#allocation2] sm:$0xff] 0.0
    $region29: #{modal_mlp_forward.1} parent=1 // pred_fallthru
      _
    %v40 = vld [vmem:[%s0] sm:$0xff]
    %v41 = vld [vmem:[%s0 + $0x8] sm:$0xff]
    %v42 = vld [vmem:[%s0 + $0x10] sm:$0xff]
    %v43 = vld [vmem:[%s0 + $0x18] sm:$0xff]
    %v44 = vld [vmem:[#allocation2] sm:$0xff]
    %v45 = vld [vmem:[#allocation3] sm:$0xff]
    %v46 = vld [vmem:[#allocation3 + $0x8] sm:$0xff]
    %v47 = vld [vmem:[#allocation3 + $0x10] sm:$0xff]
    %v48 = vld [vmem:[#allocation3 + $0x18] sm:$0xff]
    %v49 = vld [vmem:[#allocation3 + $0x20] sm:$0xff]
    %v50 = vld [vmem:[#allocation3 + $0x28] sm:$0xff]
    %v51 = vld [vmem:[#allocation3 + $0x30] sm:$0xff]
    %v52 = vld [vmem:[#allocation3 + $0x38] sm:$0xff]
    %v53 = vld [vmem:[#allocation3 + $0x40] sm:$0xff]
    %v54 = vld [vmem:[#allocation3 + $0x48] sm:$0xff]
    %v55 = vld [vmem:[#allocation3 + $0x50] sm:$0xff]
    %v56 = vld [vmem:[#allocation3 + $0x58] sm:$0xff]
    %v57 = vld [vmem:[#allocation3 + $0x60] sm:$0xff]
    %v58 = vld [vmem:[#allocation3 + $0x68] sm:$0xff]
    %v59 = vld [vmem:[#allocation3 + $0x70] sm:$0xff]
    %v60 = vld [vmem:[#allocation3 + $0x78] sm:$0xff]
    %v61 = vld [vmem:[#allocation3 + $0x80] sm:$0xff]
    %v62 = vld [vmem:[#allocation3 + $0x88] sm:$0xff]
    %v63 = vld [vmem:[#allocation3 + $0x90] sm:$0xff]
    %v64 = vld [vmem:[#allocation3 + $0x98] sm:$0xff]
    %v65 = vld [vmem:[#allocation3 + $0xa0] sm:$0xff]
    %v66 = vld [vmem:[#allocation3 + $0xa8] sm:$0xff]
    %v67 = vld [vmem:[#allocation3 + $0xb0] sm:$0xff]
    %v68 = vld [vmem:[#allocation3 + $0xb8] sm:$0xff]
    %v69 = vld [vmem:[#allocation3 + $0xc0] sm:$0xff]
    %v70 = vld [vmem:[#allocation3 + $0xc8] sm:$0xff]
    %v71 = vld [vmem:[#allocation3 + $0xd0] sm:$0xff]
    %v72 = vld [vmem:[#allocation3 + $0xd8] sm:$0xff]
    %v73 = vld [vmem:[#allocation3 + $0xe0] sm:$0xff]
    %v74 = vld [vmem:[#allocation3 + $0xe8] sm:$0xff]
    %v75 = vld [vmem:[#allocation3 + $0xf0] sm:$0xff]
    %v76 = vld [vmem:[#allocation3 + $0xf8] sm:$0xff]
    %v77 = vld [vmem:[#allocation3 + $0x100] sm:$0xff]
    %v78 = vld [vmem:[#allocation3 + $0x108] sm:$0xff]
    %v79 = vld [vmem:[#allocation3 + $0x110] sm:$0xff]
    %v80 = vld [vmem:[#allocation3 + $0x118] sm:$0xff]
    %v81 = vld [vmem:[#allocation3 + $0x120] sm:$0xff]
    %v82 = vld [vmem:[#allocation3 + $0x128] sm:$0xff]
    %v83 = vld [vmem:[#allocation3 + $0x130] sm:$0xff]
    %v84 = vld [vmem:[#allocation3 + $0x138] sm:$0xff]
    %v85 = vld [vmem:[#allocation3 + $0x140] sm:$0xff]
    %v86 = vld [vmem:[#allocation3 + $0x148] sm:$0xff]
    %v87 = vld [vmem:[#allocation3 + $0x150] sm:$0xff]
    %v88 = vld [vmem:[#allocation3 + $0x158] sm:$0xff]
    %v89 = vld [vmem:[#allocation3 + $0x160] sm:$0xff]
    %v90 = vld [vmem:[#allocation3 + $0x168] sm:$0xff]
    %v91 = vld [vmem:[#allocation3 + $0x170] sm:$0xff]
    %v92 = vld [vmem:[#allocation3 + $0x178] sm:$0xff]
    %v93 = vld [vmem:[#allocation3 + $0x180] sm:$0xff]
    %v94 = vld [vmem:[#allocation3 + $0x188] sm:$0xff]
    %v99 = vcombine.low %v40, %v41
    %v100 = vcombine.high %v40, %v41
    %v101 = vcombine.low %v42, %v43
    %v102 = vcombine.high %v42, %v43
    %v104 = vunpack.c.l.s4 1983009808
    %v105 = vunpack.c.0.s8 %v104
    %v106 = vlaneseq
    %v107 = vshrl.u32 %v106, 7
    %v108 = vsub.s32 %v105, %v107
    %v109 = vrot.slane %v99, %v108
    %v111 = vunpack.c.l.s4 1983009808
    %v112 = vunpack.c.0.s8 %v111
    %v113 = vlaneseq
    %v114 = vshrl.u32 %v113, 7
    %v115 = vsub.s32 %v112, %v114
    %v116 = vrot.slane %v100, %v115
    %v118 = vunpack.c.l.s4 1983009808
    %v119 = vunpack.c.0.s8 %v118
    %v120 = vlaneseq
    %v121 = vshrl.u32 %v120, 7
    %v122 = vsub.s32 %v119, %v121
    %v123 = vrot.slane %v101, %v122
    %v125 = vunpack.c.l.s4 1983009808
    %v126 = vunpack.c.0.s8 %v125
    %v127 = vlaneseq
    %v128 = vshrl.u32 %v127, 7
    %v129 = vsub.s32 %v126, %v128
    %v130 = vrot.slane %v102, %v129
    %v131 = vcombine.low %v109, %v123
    %v132 = vcombine.high %v109, %v123
    %v133 = vcombine.low %v116, %v130
    %v134 = vcombine.high %v116, %v130
    %vm138 = vcmask 130048
    %v139 = vsel %vm138, %v134, 0
    %141 = vmatprep.subr.mxu0 0.0
    %142 = vmatpush1.msra.mxu0 %v45
    %143 = vmatprep.subr.mxu0 0.0
    %144 = vmatpush1.msra.mxu0 %v46
    %145 = vmatprep.subr.mxu0 0.0
    %146 = vmatpush1.msra.mxu0 %v47
    %147 = vmatprep.subr.mxu0 0.0
    %148 = vmatpush1.msra.mxu0 %v48
    %149 = vmatprep.subr.mxu0 0.0
    %150 = vmatpush1.msra.mxu0 %v49
    %151 = vmatprep.subr.mxu0 0.0
    %152 = vmatpush1.msra.mxu0 %v50
    %153 = vmatprep.subr.mxu0 0.0
    %154 = vmatpush1.msra.mxu0 %v51
    %155 = vmatprep.subr.mxu0 0.0
    %156 = vmatpush1.msra.mxu0 %v52
    %157 = vmatprep.subr.mxu0 0.0
    %158 = vmatpush1.msra.mxu0 %v53
    %159 = vmatprep.subr.mxu0 0.0
    %160 = vmatpush1.msra.mxu0 %v54
    %161 = vmatprep.subr.mxu0 0.0
    %162 = vmatpush1.msra.mxu0 %v55
    %163 = vmatprep.subr.mxu0 0.0
    %164 = vmatpush1.msra.mxu0 %v56
    %165 = vmatprep.subr.mxu0 0.0
    %166 = vmatpush1.msra.mxu0 %v57
    %167 = vmatprep.subr.mxu0 0.0
    %168 = vmatpush1.msra.mxu0 %v58
    %169 = vmatprep.subr.mxu0 0.0
    %170 = vmatpush1.msra.mxu0 %v59
    %171 = vmatprep.subr.mxu0 0.0
    %172 = vmatpush1.msra.mxu0 %v60
    %173 = vmatprep.subr.mxu0 0.0
    %174 = vmatpush1.msra.mxu0 %v61
    %175 = vmatprep.subr.mxu0 0.0
    %176 = vmatpush1.msra.mxu0 %v62
    %177 = vmatprep.subr.mxu0 0.0
    %178 = vmatpush1.msra.mxu0 %v63
    %179 = vmatprep.subr.mxu0 0.0
    %180 = vmatpush1.msra.mxu0 %v64
    %181 = vmatprep.subr.mxu0 0.0
    %182 = vmatpush1.msra.mxu0 %v65
    %183 = vmatprep.subr.mxu0 0.0
    %184 = vmatpush1.msra.mxu0 %v66
    %185 = vmatprep.subr.mxu0 0.0
    %186 = vmatpush1.msra.mxu0 %v67
    %187 = vmatprep.subr.mxu0 0.0
    %188 = vmatpush1.msra.mxu0 %v68
    %189 = vmatprep.subr.mxu0 0.0
    %190 = vmatpush1.msra.mxu0 %v69
    %191 = vmatprep.subr.mxu0 0.0
    %192 = vmatpush1.msra.mxu0 %v70
    %193 = vmatprep.subr.mxu0 0.0
    %194 = vmatpush1.msra.mxu0 %v71
    %195 = vmatprep.subr.mxu0 0.0
    %196 = vmatpush1.msra.mxu0 %v72
    %197 = vmatprep.subr.mxu0 0.0
    %198 = vmatpush1.msra.mxu0 %v73
    %199 = vmatprep.subr.mxu0 0.0
    %200 = vmatpush1.msra.mxu0 %v74
    %201 = vmatprep.subr.mxu0 0.0
    %202 = vmatpush1.msra.mxu0 %v75
    %203 = vmatprep.subr.mxu0 0.0
    %204 = vmatpush1.msra.mxu0 %v76
    %205 = vmatprep.mubr.f32.mxu0 %v132
    %206 = vmatmul.mubr.f32.gmra.mrb[0].mxu0 %v131
    %v207 = vpop.f32.mrb[0].mxu0
    %v208 = vadd.f32 0.0, %v207
    %v209 = vpop.f32.mrb[0].mxu0
    %210 = vdwg.mxu0
    %211 = vmatprep.subr.mxu0 0.0
    %212 = vmatpush1.msra.mxu0 %v77
    %213 = vmatprep.subr.mxu0 0.0
    %214 = vmatpush1.msra.mxu0 %v78
    %215 = vmatprep.subr.mxu0 0.0
    %216 = vmatpush1.msra.mxu0 %v79
    %217 = vmatprep.subr.mxu0 0.0
    %218 = vmatpush1.msra.mxu0 %v80
    %219 = vmatprep.subr.mxu0 0.0
    %220 = vmatpush1.msra.mxu0 %v81
    %221 = vmatprep.subr.mxu0 0.0
    %222 = vmatpush1.msra.mxu0 %v82
    %223 = vmatprep.subr.mxu0 0.0
    %224 = vmatpush1.msra.mxu0 %v83
    %225 = vmatprep.subr.mxu0 0.0
    %226 = vmatpush1.msra.mxu0 %v84
    %227 = vmatprep.subr.mxu0 0.0
    %228 = vmatpush1.msra.mxu0 %v85
    %229 = vmatprep.subr.mxu0 0.0
    %230 = vmatpush1.msra.mxu0 %v86
    %231 = vmatprep.subr.mxu0 0.0
    %232 = vmatpush1.msra.mxu0 %v87
    %233 = vmatprep.subr.mxu0 0.0
    %234 = vmatpush1.msra.mxu0 %v88
    %235 = vmatprep.subr.mxu0 0.0
    %236 = vmatpush1.msra.mxu0 %v89
    %237 = vmatprep.subr.mxu0 0.0
    %238 = vmatpush1.msra.mxu0 %v90
    %239 = vmatprep.subr.mxu0 0.0
    %240 = vmatpush1.msra.mxu0 %v91
    %241 = vmatprep.subr.mxu0 0.0
    %242 = vmatpush1.msra.mxu0 %v92
    %243 = vmatprep.subr.mxu0 0.0
    %244 = vmatpush1.msra.mxu0 %v93
    %245 = vmatprep.subr.mxu0 0.0
    %246 = vmatpush1.msra.mxu0 %v94
    %247 = vmatprep.subr.mxu0 0.0
    %248 = vmatpush1.msra.mxu0 0.0
    %249 = vmatprep.subr.mxu0 0.0
    %250 = vmatpush1.msra.mxu0 0.0
    %251 = vmatprep.subr.mxu0 0.0
    %252 = vmatpush1.msra.mxu0 0.0
    %253 = vmatprep.subr.mxu0 0.0
    %254 = vmatpush1.msra.mxu0 0.0
    %255 = vmatprep.subr.mxu0 0.0
    %256 = vmatpush1.msra.mxu0 0.0
    %257 = vmatprep.subr.mxu0 0.0
    %258 = vmatpush1.msra.mxu0 0.0
    %259 = vmatprep.subr.mxu0 0.0
    %260 = vmatpush1.msra.mxu0 0.0
    %261 = vmatprep.subr.mxu0 0.0
    %262 = vmatpush1.msra.mxu0 0.0
    %263 = vmatprep.subr.mxu0 0.0
    %264 = vmatpush1.msra.mxu0 0.0
    %265 = vmatprep.subr.mxu0 0.0
    %266 = vmatpush1.msra.mxu0 0.0
    %267 = vmatprep.subr.mxu0 0.0
    %268 = vmatpush1.msra.mxu0 0.0
    %269 = vmatprep.subr.mxu0 0.0
    %270 = vmatpush1.msra.mxu0 0.0
    %271 = vmatprep.subr.mxu0 0.0
    %272 = vmatpush1.msra.mxu0 0.0
    %273 = vmatprep.subr.mxu0 0.0
    %274 = vmatpush1.msra.mxu0 0.0
    %275 = vmatprep.mubr.f32.mxu0 %v139
    %276 = vmatmul.mubr.f32.gmra.mrb[0].mxu0 %v133
    %v277 = vpop.f32.mrb[0].mxu0
    %v278 = vadd.f32 %v208, %v277
    %v279 = vpop.f32.mrb[0].mxu0
    %280 = vdwg.mxu0
    %v281 = vadd.f32 %v44, %v278
    %282 = vst [vmem:[#allocation2] sm:$0xff] %v281
    // Predicated region
    $region30: #{modal_mlp_forward.1} parent=1 // pred_check
      %p283 = pneg %p35
    $region31: #{modal_mlp_forward.1} parent=1 // pred_check_branch
      %285 = sbr.rel (%p283) target = $region33
    $region32: #{modal_mlp_forward.1} parent=1 // pred_region
      %v286 = vld [vmem:[#allocation2] sm:$0xff]
      %v287 = vld [vmem:[%s2] sm:$0x1]
      %v289 = vlaneseq
      %v290 = vshrl.u32 %v289, 7
      %v291 = vsub.s32 0, %v290
      %v292 = vrot.slane %v287, %v291
      %v294 = vadd.f32 %v286, %v292
      %v295 = vmax.f32 %v294, 0.0
      %v296 = vld [vmem:[%s3] sm:$0xff]
      %v297 = vld [vmem:[%s3 + $0x8] sm:$0xff]
      %v298 = vld [vmem:[%s3 + $0x10] sm:$0xff]
      %v299 = vld [vmem:[%s3 + $0x18] sm:$0xff]
      %v300 = vld [vmem:[%s3 + $0x20] sm:$0xff]
      %v301 = vld [vmem:[%s3 + $0x28] sm:$0xff]
      %v302 = vld [vmem:[%s3 + $0x30] sm:$0xff]
      %v303 = vld [vmem:[%s3 + $0x38] sm:$0xff]
      %v304 = vld [vmem:[%s3 + $0x40] sm:$0xff]
      %v305 = vld [vmem:[%s3 + $0x48] sm:$0xff]
      %v306 = vld [vmem:[%s3 + $0x50] sm:$0xff]
      %v307 = vld [vmem:[%s3 + $0x58] sm:$0xff]
      %v308 = vld [vmem:[%s3 + $0x60] sm:$0xff]
      %v309 = vld [vmem:[%s3 + $0x68] sm:$0xff]
      %v310 = vld [vmem:[%s3 + $0x70] sm:$0xff]
      %v311 = vld [vmem:[%s3 + $0x78] sm:$0xff]
      %v312 = vld [vmem:[%s4] sm:$0x1]
      %v314 = vlaneseq
      %v315 = vshrl.u32 %v314, 7
      %v316 = vsub.s32 0, %v315
      %v317 = vrot.slane %v312, %v316
      %319 = vmatprep.subr.mxu0 0.0
      %320 = vmatpush1.msra.mxu0 %v296
      %321 = vmatprep.subr.mxu0 0.0
      %322 = vmatpush1.msra.mxu0 %v297
      %323 = vmatprep.subr.mxu0 0.0
      %324 = vmatpush1.msra.mxu0 %v298
      %325 = vmatprep.subr.mxu0 0.0
      %326 = vmatpush1.msra.mxu0 %v299
      %327 = vmatprep.subr.mxu0 0.0
      %328 = vmatpush1.msra.mxu0 %v300
      %329 = vmatprep.subr.mxu0 0.0
      %330 = vmatpush1.msra.mxu0 %v301
      %331 = vmatprep.subr.mxu0 0.0
      %332 = vmatpush1.msra.mxu0 %v302
      %333 = vmatprep.subr.mxu0 0.0
      %334 = vmatpush1.msra.mxu0 %v303
      %335 = vmatprep.subr.mxu0 0.0
      %336 = vmatpush1.msra.mxu0 %v304
      %337 = vmatprep.subr.mxu0 0.0
      %338 = vmatpush1.msra.mxu0 %v305
      %339 = vmatprep.subr.mxu0 0.0
      %340 = vmatpush1.msra.mxu0 %v306
      %341 = vmatprep.subr.mxu0 0.0
      %342 = vmatpush1.msra.mxu0 %v307
      %343 = vmatprep.subr.mxu0 0.0
      %344 = vmatpush1.msra.mxu0 %v308
      %345 = vmatprep.subr.mxu0 0.0
      %346 = vmatpush1.msra.mxu0 %v309
      %347 = vmatprep.subr.mxu0 0.0
      %348 = vmatpush1.msra.mxu0 %v310
      %349 = vmatprep.subr.mxu0 0.0
      %350 = vmatpush1.msra.mxu0 %v311
      %351 = vmatprep.subr.mxu0 0.0
      %352 = vmatpush1.msra.mxu0 0.0
      %353 = vmatprep.subr.mxu0 0.0
      %354 = vmatpush1.msra.mxu0 0.0
      %355 = vmatprep.subr.mxu0 0.0
      %356 = vmatpush1.msra.mxu0 0.0
      %357 = vmatprep.subr.mxu0 0.0
      %358 = vmatpush1.msra.mxu0 0.0
      %359 = vmatprep.subr.mxu0 0.0
      %360 = vmatpush1.msra.mxu0 0.0
      %361 = vmatprep.subr.mxu0 0.0
      %362 = vmatpush1.msra.mxu0 0.0
      %363 = vmatprep.subr.mxu0 0.0
      %364 = vmatpush1.msra.mxu0 0.0
      %365 = vmatprep.subr.mxu0 0.0
      %366 = vmatpush1.msra.mxu0 0.0
      %367 = vmatprep.subr.mxu0 0.0
      %368 = vmatpush1.msra.mxu0 0.0
      %369 = vmatprep.subr.mxu0 0.0
      %370 = vmatpush1.msra.mxu0 0.0
      %371 = vmatprep.subr.mxu0 0.0
      %372 = vmatpush1.msra.mxu0 0.0
      %373 = vmatprep.subr.mxu0 0.0
      %374 = vmatpush1.msra.mxu0 0.0
      %375 = vmatprep.subr.mxu0 0.0
      %376 = vmatpush1.msra.mxu0 0.0
      %377 = vmatprep.subr.mxu0 0.0
      %378 = vmatpush1.msra.mxu0 0.0
      %379 = vmatprep.subr.mxu0 0.0
      %380 = vmatpush1.msra.mxu0 0.0
      %381 = vmatprep.subr.mxu0 0.0
      %382 = vmatpush1.msra.mxu0 0.0
      %383 = vmatprep.mubr.f32.mxu0 0.0
      %384 = vmatmul.mubr.f32.gmra.mrb[0].mxu0 %v295
      %v385 = vpop.f32.mrb[0].mxu0
      %v386 = vadd.f32 %v317, %v385
      %v387 = vpop.f32.mrb[0].mxu0
      %388 = vdwg.mxu0
      %v389 = vmax.f32 %v386, 0.0
      %vm390 = vcmask 523264
      %391 = vst.msk [vmem:[#allocation6] sm:$0xff] %vm390, %v389
    $region33: #{modal_mlp_forward.1} parent=1 // pred_fallthru
      _
    // Predicated region
    $region34: #{modal_mlp_forward.1} parent=1 // pred_check
      _
    $region35: #{modal_mlp_forward.1} parent=1 // pred_check_branch
      %393 = sbr.rel (0) target = $region37
    $region36: #{modal_mlp_forward.1} parent=1 // pred_region
      %s395 = ssub.s32 128, 32
      %396 = vsyncadd [#allocation5], %s395
      %s397 = sshll.u32 [#allocation6], 4
      %s398 = int_to_ptr.vmem [resolvable:$true] %s397
      %403 = dma.vmem_to_hbm [thread:$0]  %s398, 32, %s5, [#allocation5], 32, 32, 2
    $region37: #{modal_mlp_forward.1} parent=1 // pred_fallthru
      _
    // Predicated region
    $region38: #{modal_mlp_forward.1} parent=1 // pred_check
      _
    $region39: #{modal_mlp_forward.1} parent=1 // pred_check_branch
      %405 = sbr.rel (0) target = $region41
    $region40: #{modal_mlp_forward.1} parent=1 // pred_region
      %406 = dma.done [#allocation5], 128
    $region41: #{modal_mlp_forward.1} parent=1 // pred_fallthru
      _
    %407 = vsyncpa [#allocation4], 1
    %408 = vsyncpa [#allocation5], 1

</llo_original>
